<compile_context>
chip_gen: v5e
topology: v5e:2x2
jax: 0.10.0
libtpu: 0.0.40
codegen_flags: <defaults>
</compile_context>

<pallas_src>
import numpy as np
import jax
import jax.numpy as jnp
from jax import lax
from jax.experimental import pallas as pl
from jax.experimental.pallas import tpu as pltpu


_VMEM_BUDGET_BYTES = 24 * 1024 * 1024   # tile-sizing budget, safe for v7x's 64 MiB VMEM
_VMEM_LIMIT_BYTES = 32 * 1024 * 1024    # scoped-VMEM limit handed to Mosaic
_XLA_FALLBACK_BYTES = 256 * 1024        # below this, XLA gather beats kernel launch cost


def _gather_rows_kernel(idx_ref, x_ref, o_ref):
    """Gather R rows (sublane axis) from a VMEM-resident (n, TD) table.

    idx_ref : (k,) int32 in SMEM (scalar prefetch)
    x_ref   : (n, TD) source tile; its block index is constant along the gather
              grid axis, so Pallas keeps it resident (fetched once per D-tile).
    o_ref   : (R, TD) dense output tile (R rows -> unmasked, sublane-dense store).
    """
    i = pl.program_id(2)
    k = idx_ref.shape[0]
    n = x_ref.shape[0]
    r_per_step = o_ref.shape[0]
    for r in range(r_per_step):                          # small static unroll (<=32)
        flat = jnp.minimum(i * r_per_step + r, k - 1)    # clamp for partial last block
        row = jnp.clip(idx_ref[flat], 0, n - 1)          # clamp OOB indices (torch raises)
        o_ref[pl.ds(r, 1), :] = x_ref[pl.ds(row, 1), :]


def _gather_lanes_kernel(idx_ref, x_ref, o_ref, xt_ref, ot_ref):
    """index_select along the minor (lane) axis, exact, no HBM relayout.

    The (TA, n) tile is transposed once in VMEM (XLU), rows are gathered with
    exact dynamic sublane copies, and the result is transposed back.
    idx_ref : (k,) int32 SMEM   x_ref : (TA, n)   o_ref : (TA, k)
    xt_ref  : (n, TA) scratch   ot_ref: (k, TA) scratch
    """
    n = x_ref.shape[1]
    k = o_ref.shape[1]
    xt_ref[...] = jnp.swapaxes(x_ref[...], 0, 1)

    def body(c, carry):
        col = jnp.clip(idx_ref[c], 0, n - 1)
        ot_ref[pl.ds(c, 1), :] = xt_ref[pl.ds(col, 1), :]
        return carry

    lax.fori_loop(0, k, body, 0, unroll=(k <= 32))
    o_ref[...] = jnp.swapaxes(ot_ref[...], 0, 1)


def _gather_rows_pallas(x3, idx, r_per_step, td):
    a_dim, n, b_dim = x3.shape
    k = idx.shape[0]
    grid = (a_dim, pl.cdiv(b_dim, td), pl.cdiv(k, r_per_step))
    return pl.pallas_call(
        _gather_rows_kernel,
        out_shape=jax.ShapeDtypeStruct((a_dim, k, b_dim), x3.dtype),
        grid_spec=pltpu.PrefetchScalarGridSpec(
            num_scalar_prefetch=1,
            grid=grid,
            # Source block is independent of the gather axis i -> resident in VMEM.
            in_specs=[pl.BlockSpec((None, n, td), lambda a, j, i, idx_ref: (a, 0, j))],
            out_specs=pl.BlockSpec((None, r_per_step, td),
                                   lambda a, j, i, idx_ref: (a, i, j)),
        ),
        compiler_params=pltpu.CompilerParams(
            dimension_semantics=("parallel", "parallel", "parallel"),
            vmem_limit_bytes=_VMEM_LIMIT_BYTES,
        ),
    )(idx, x3)


def _gather_lanes_pallas(x2, idx, ta):
    a_dim, n = x2.shape
    k = idx.shape[0]
    grid = (pl.cdiv(a_dim, ta),)
    return pl.pallas_call(
        _gather_lanes_kernel,
        out_shape=jax.ShapeDtypeStruct((a_dim, k), x2.dtype),
        grid_spec=pltpu.PrefetchScalarGridSpec(
            num_scalar_prefetch=1,
            grid=grid,
            in_specs=[pl.BlockSpec((ta, n), lambda a, idx_ref: (a, 0))],
            out_specs=pl.BlockSpec((ta, k), lambda a, idx_ref: (a, 0)),
            scratch_shapes=[pltpu.VMEM((n, ta), x2.dtype),
                            pltpu.VMEM((k, ta), x2.dtype)],
        ),
        compiler_params=pltpu.CompilerParams(
            dimension_semantics=("parallel",),
            vmem_limit_bytes=_VMEM_LIMIT_BYTES,
        ),
    )(idx, x2)


def index_select(tensor, dimension, index, *, force_pallas=False):
    """Pallas TPU equivalent of torch.index_select(tensor, dimension, index).

    Precondition: 0 <= index[i] < tensor.shape[dimension] (out-of-range values
    are clamped instead of raising like torch does).
    """
    tensor = jnp.asarray(tensor)
    index = jnp.asarray(index)
    if index.ndim != 1:
        raise ValueError("index must be 1-D")
    ndim = tensor.ndim
    if ndim == 0:
        raise ValueError("tensor must have at least 1 dimension")
    dim = dimension % ndim
    k = int(index.shape[0])
    shape = tensor.shape
    out_shape = shape[:dim] + (k,) + shape[dim + 1:]
    itemsize = tensor.dtype.itemsize

    # Degenerate / tiny problems: XLA's gather beats pallas_call launch overhead.
    if k == 0:
        return jnp.take(tensor, index.astype(jnp.int32), axis=dim)
    if not force_pallas:
        work_bytes = (tensor.size + int(np.prod(out_shape))) * itemsize
        if work_bytes < _XLA_FALLBACK_BYTES:
            return jnp.take(tensor, index.astype(jnp.int32), axis=dim)

    idx = index.astype(jnp.int32)

    if dim < ndim - 1:
        # Gather along a non-minor axis: FREE contiguous reshape to (A, n, B);
        # the original trailing axes remain the lane axis (no moveaxis).
        a_dim = int(np.prod(shape[:dim])) if dim > 0 else 1
        n = shape[dim]
        b_dim = int(np.prod(shape[dim + 1:]))
        r_per_step = min({4: 8, 2: 16, 1: 32}.get(itemsize, 8), k)
        per_lane_bytes = 2 * (n + r_per_step) * itemsize   # double-buffered in + out blocks
        cands = ([b_dim] if b_dim <= 1024 else []) + [t for t in (512, 256, 128) if t < b_dim]
        td = next((t for t in cands if per_lane_bytes * t <= _VMEM_BUDGET_BYTES), None)
        if td is None:
            # TODO(synk): tables too large for a VMEM-resident (n, TD) slab — add a
            # batched manual-DMA row gather (memory_space=pl.ANY + make_async_copy).
            return jnp.take(tensor, idx, axis=dim)
        out3 = _gather_rows_pallas(tensor.reshape(a_dim, n, b_dim), idx, r_per_step, td)
        return out3.reshape(out_shape)

    # Gather along the minor (lane) axis: FREE reshape to (A, n); columns are
    # gathered via one in-VMEM transpose per tile (no HBM relayout passes).
    a_dim = int(np.prod(shape[:-1])) if ndim > 1 else 1
    n = shape[-1]
    fits = lambda ta: 3 * ta * (n + k) * itemsize <= _VMEM_BUDGET_BYTES
    cands = ([a_dim] if a_dim <= 1024 else []) + \
            [t for t in (512, 256, 128, 64, 32, 16, 8) if t < a_dim]
    ta = next((t for t in cands if fits(t)), None)
    if ta is None or itemsize not in (2, 4):
        # TODO(synk): very large n/k or 1-byte dtypes on the minor axis — fall back
        # to XLA's gather rather than faking an in-kernel lane gather.
        return jnp.take(tensor, idx, axis=dim)
    out2 = _gather_lanes_pallas(tensor.reshape(a_dim, n), idx, ta)
    return out2.reshape(out_shape)


if __name__ == "__main__":
    key = jax.random.PRNGKey(0)
    k_t, k_i0, k_i1, k_t3, k_i2, k_t4, k_i3 = jax.random.split(key, 7)

    # 2-D tensor (seq=8, hidden=32), as in the torch_glow test.
    t2 = jax.random.normal(k_t, (8, 32), dtype=jnp.float32)

    # dimension = 0 (row gather)
    i0 = jax.random.randint(k_i0, (5,), 0, t2.shape[0], dtype=jnp.int32)
    o0 = jax.block_until_ready(index_select(t2, 0, i0, force_pallas=True))
    r0 = jnp.take(t2, i0, axis=0)
    assert o0.shape == r0.shape and o0.dtype == r0.dtype
    np.testing.assert_array_equal(np.asarray(o0), np.asarray(r0))

    # dimension = 1 (minor / lane-axis gather)
    i1 = jax.random.randint(k_i1, (7,), 0, t2.shape[1], dtype=jnp.int32)
    o1 = jax.block_until_ready(index_select(t2, 1, i1, force_pallas=True))
    r1 = jnp.take(t2, i1, axis=1)
    assert o1.shape == r1.shape and o1.dtype == r1.dtype
    np.testing.assert_array_equal(np.asarray(o1), np.asarray(r1))

    # 3-D tensor, middle-axis gather (batch=2, seq=8, hidden=32).
    t3 = jax.random.normal(k_t3, (2, 8, 32), dtype=jnp.float32)
    i2 = jax.random.randint(k_i2, (6,), 0, t3.shape[1], dtype=jnp.int32)
    o2 = jax.block_until_ready(index_select(t3, 1, i2, force_pallas=True))
    r2 = jnp.take(t3, i2, axis=1)
    assert o2.shape == r2.shape and o2.dtype == r2.dtype
    np.testing.assert_array_equal(np.asarray(o2), np.asarray(r2))

    # Larger row gather exercising R=8 batching and a partial last block.
    t4 = jax.random.normal(k_t4, (64, 256), dtype=jnp.float32)
    i3 = jax.random.randint(k_i3, (20,), 0, t4.shape[0], dtype=jnp.int32)
    o3 = jax.block_until_ready(index_select(t4, 0, i3, force_pallas=True))
    r3 = jnp.take(t4, i3, axis=0)
    assert o3.shape == r3.shape and o3.dtype == r3.dtype
    np.testing.assert_array_equal(np.asarray(o3), np.asarray(r3))

    print("KERNEL_OK")
</pallas_src>

<mosaic_0001>
module attributes {stable_mosaic.version = 11 : i64} {
  func.func @_gather_rows_kernel(%arg0: i32, %arg1: i32, %arg2: i32, %arg3: memref<5xi32, #tpu.memory_space<smem>>, %arg4: memref<1x8x32xf32, #tpu.memory_space<vmem>>, %arg5: memref<1x5x32xf32, #tpu.memory_space<vmem>>) attributes {dimension_semantics = [#tpu.dimension_semantics<parallel>, #tpu.dimension_semantics<parallel>, #tpu.dimension_semantics<parallel>], iteration_bounds = array<i64: 1, 1, 1>, scalar_prefetch = 1 : i64, scratch_operands = 0 : i64, tpu.core_type = #tpu.core_type<tc>, window_params = [{transform_indices = @transform_0, window_bounds = array<i64: 1, 8, 32>}, {transform_indices = @transform_1, window_bounds = array<i64: 1, 5, 32>}]} {
    %c5_i32 = arith.constant 5 : i32
    %0 = arith.muli %arg2, %c5_i32 : i32
    %c0_i32 = arith.constant 0 : i32
    %1 = arith.addi %0, %c0_i32 : i32
    %c4_i32 = arith.constant 4 : i32
    %2 = arith.minsi %1, %c4_i32 : i32
    %3 = arith.index_cast %2 : i32 to index
    %4 = memref.load %arg3[%3] : memref<5xi32, #tpu.memory_space<smem>>
    %c0_i32_0 = arith.constant 0 : i32
    %c7_i32 = arith.constant 7 : i32
    %5 = arith.maxsi %c0_i32_0, %4 : i32
    %6 = arith.minsi %c7_i32, %5 : i32
    %c0 = arith.constant 0 : index
    %7 = arith.index_cast %6 : i32 to index
    %c0_1 = arith.constant 0 : index
    %8 = vector.load %arg4[%c0, %7, %c0_1] : memref<1x8x32xf32, #tpu.memory_space<vmem>>, vector<1x1x32xf32>
    %9 = vector.shape_cast %8 : vector<1x1x32xf32> to vector<1x32xf32>
    %c0_2 = arith.constant 0 : index
    %c0_3 = arith.constant 0 : index
    %c0_4 = arith.constant 0 : index
    %10 = vector.load %arg5[%c0_2, %c0_3, %c0_4] : memref<1x5x32xf32, #tpu.memory_space<vmem>>, vector<1x1x32xf32>
    %11 = vector.shape_cast %10 : vector<1x1x32xf32> to vector<1x32xf32>
    %12 = vector.shape_cast %9 : vector<1x32xf32> to vector<1x1x32xf32>
    tpu.vector_store %arg5[%c0_2, %c0_3, %c0_4], %12 {strides = array<i32>} : memref<1x5x32xf32, #tpu.memory_space<vmem>>, vector<1x1x32xf32>,
    %c5_i32_5 = arith.constant 5 : i32
    %13 = arith.muli %arg2, %c5_i32_5 : i32
    %c1_i32 = arith.constant 1 : i32
    %14 = arith.addi %13, %c1_i32 : i32
    %c4_i32_6 = arith.constant 4 : i32
    %15 = arith.minsi %14, %c4_i32_6 : i32
    %16 = arith.index_cast %15 : i32 to index
    %17 = memref.load %arg3[%16] : memref<5xi32, #tpu.memory_space<smem>>
    %c0_i32_7 = arith.constant 0 : i32
    %c7_i32_8 = arith.constant 7 : i32
    %18 = arith.maxsi %c0_i32_7, %17 : i32
    %19 = arith.minsi %c7_i32_8, %18 : i32
    %c0_9 = arith.constant 0 : index
    %20 = arith.index_cast %19 : i32 to index
    %c0_10 = arith.constant 0 : index
    %21 = vector.load %arg4[%c0_9, %20, %c0_10] : memref<1x8x32xf32, #tpu.memory_space<vmem>>, vector<1x1x32xf32>
    %22 = vector.shape_cast %21 : vector<1x1x32xf32> to vector<1x32xf32>
    %c0_11 = arith.constant 0 : index
    %c1 = arith.constant 1 : index
    %c0_12 = arith.constant 0 : index
    %23 = vector.load %arg5[%c0_11, %c1, %c0_12] : memref<1x5x32xf32, #tpu.memory_space<vmem>>, vector<1x1x32xf32>
    %24 = vector.shape_cast %23 : vector<1x1x32xf32> to vector<1x32xf32>
    %25 = vector.shape_cast %22 : vector<1x32xf32> to vector<1x1x32xf32>
    tpu.vector_store %arg5[%c0_11, %c1, %c0_12], %25 {strides = array<i32>} : memref<1x5x32xf32, #tpu.memory_space<vmem>>, vector<1x1x32xf32>,
    %c5_i32_13 = arith.constant 5 : i32
    %26 = arith.muli %arg2, %c5_i32_13 : i32
    %c2_i32 = arith.constant 2 : i32
    %27 = arith.addi %26, %c2_i32 : i32
    %c4_i32_14 = arith.constant 4 : i32
    %28 = arith.minsi %27, %c4_i32_14 : i32
    %29 = arith.index_cast %28 : i32 to index
    %30 = memref.load %arg3[%29] : memref<5xi32, #tpu.memory_space<smem>>
    %c0_i32_15 = arith.constant 0 : i32
    %c7_i32_16 = arith.constant 7 : i32
    %31 = arith.maxsi %c0_i32_15, %30 : i32
    %32 = arith.minsi %c7_i32_16, %31 : i32
    %c0_17 = arith.constant 0 : index
    %33 = arith.index_cast %32 : i32 to index
    %c0_18 = arith.constant 0 : index
    %34 = vector.load %arg4[%c0_17, %33, %c0_18] : memref<1x8x32xf32, #tpu.memory_space<vmem>>, vector<1x1x32xf32>
    %35 = vector.shape_cast %34 : vector<1x1x32xf32> to vector<1x32xf32>
    %c0_19 = arith.constant 0 : index
    %c2 = arith.constant 2 : index
    %c0_20 = arith.constant 0 : index
    %36 = vector.load %arg5[%c0_19, %c2, %c0_20] : memref<1x5x32xf32, #tpu.memory_space<vmem>>, vector<1x1x32xf32>
    %37 = vector.shape_cast %36 : vector<1x1x32xf32> to vector<1x32xf32>
    %38 = vector.shape_cast %35 : vector<1x32xf32> to vector<1x1x32xf32>
    tpu.vector_store %arg5[%c0_19, %c2, %c0_20], %38 {strides = array<i32>} : memref<1x5x32xf32, #tpu.memory_space<vmem>>, vector<1x1x32xf32>,
    %c5_i32_21 = arith.constant 5 : i32
    %39 = arith.muli %arg2, %c5_i32_21 : i32
    %c3_i32 = arith.constant 3 : i32
    %40 = arith.addi %39, %c3_i32 : i32
    %c4_i32_22 = arith.constant 4 : i32
    %41 = arith.minsi %40, %c4_i32_22 : i32
    %42 = arith.index_cast %41 : i32 to index
    %43 = memref.load %arg3[%42] : memref<5xi32, #tpu.memory_space<smem>>
    %c0_i32_23 = arith.constant 0 : i32
    %c7_i32_24 = arith.constant 7 : i32
    %44 = arith.maxsi %c0_i32_23, %43 : i32
    %45 = arith.minsi %c7_i32_24, %44 : i32
    %c0_25 = arith.constant 0 : index
    %46 = arith.index_cast %45 : i32 to index
    %c0_26 = arith.constant 0 : index
    %47 = vector.load %arg4[%c0_25, %46, %c0_26] : memref<1x8x32xf32, #tpu.memory_space<vmem>>, vector<1x1x32xf32>
    %48 = vector.shape_cast %47 : vector<1x1x32xf32> to vector<1x32xf32>
    %c0_27 = arith.constant 0 : index
    %c3 = arith.constant 3 : index
    %c0_28 = arith.constant 0 : index
    %49 = vector.load %arg5[%c0_27, %c3, %c0_28] : memref<1x5x32xf32, #tpu.memory_space<vmem>>, vector<1x1x32xf32>
    %50 = vector.shape_cast %49 : vector<1x1x32xf32> to vector<1x32xf32>
    %51 = vector.shape_cast %48 : vector<1x32xf32> to vector<1x1x32xf32>
    tpu.vector_store %arg5[%c0_27, %c3, %c0_28], %51 {strides = array<i32>} : memref<1x5x32xf32, #tpu.memory_space<vmem>>, vector<1x1x32xf32>,
    %c5_i32_29 = arith.constant 5 : i32
    %52 = arith.muli %arg2, %c5_i32_29 : i32
    %c4_i32_30 = arith.constant 4 : i32
    %53 = arith.addi %52, %c4_i32_30 : i32
    %c4_i32_31 = arith.constant 4 : i32
    %54 = arith.minsi %53, %c4_i32_31 : i32
    %55 = arith.index_cast %54 : i32 to index
    %56 = memref.load %arg3[%55] : memref<5xi32, #tpu.memory_space<smem>>
    %c0_i32_32 = arith.constant 0 : i32
    %c7_i32_33 = arith.constant 7 : i32
    %57 = arith.maxsi %c0_i32_32, %56 : i32
    %58 = arith.minsi %c7_i32_33, %57 : i32
    %c0_34 = arith.constant 0 : index
    %59 = arith.index_cast %58 : i32 to index
    %c0_35 = arith.constant 0 : index
    %60 = vector.load %arg4[%c0_34, %59, %c0_35] : memref<1x8x32xf32, #tpu.memory_space<vmem>>, vector<1x1x32xf32>
    %61 = vector.shape_cast %60 : vector<1x1x32xf32> to vector<1x32xf32>
    %c0_36 = arith.constant 0 : index
    %c4 = arith.constant 4 : index
    %c0_37 = arith.constant 0 : index
    %62 = vector.load %arg5[%c0_36, %c4, %c0_37] : memref<1x5x32xf32, #tpu.memory_space<vmem>>, vector<1x1x32xf32>
    %63 = vector.shape_cast %62 : vector<1x1x32xf32> to vector<1x32xf32>
    %64 = vector.shape_cast %61 : vector<1x32xf32> to vector<1x1x32xf32>
    tpu.vector_store %arg5[%c0_36, %c4, %c0_37], %64 {strides = array<i32>} : memref<1x5x32xf32, #tpu.memory_space<vmem>>, vector<1x1x32xf32>,
    return
  }
  func.func @transform_0(%arg0: i32, %arg1: i32, %arg2: i32, %arg3: memref<5xi32, #tpu.memory_space<smem>>) -> (i32, i32, i32) {
    %c0_i32 = arith.constant 0 : i32
    %c0_i32_0 = arith.constant 0 : i32
    return %arg0, %c0_i32, %arg1 : i32, i32, i32
  }
  func.func @transform_1(%arg0: i32, %arg1: i32, %arg2: i32, %arg3: memref<5xi32, #tpu.memory_space<smem>>) -> (i32, i32, i32) {
    %c0_i32 = arith.constant 0 : i32
    return %arg0, %arg2, %arg1 : i32, i32, i32
  }
}

</mosaic_0001>

<llo_original>
// kernel: tpu_custom_call.1
$region0: #{tpu_custom_call.1}
  #allocation0 [shape = 'u32[]', space=smem, size = 0x4, offset = 0x4, fixed_abs, tag = 'smem constant byte address 0x4 - core index']
  #allocation1 [shape = 'u32[72,128]{1,0:T(1,128)}', space=vmem, size = 0x9000, scoped, tag = 'internal scratch']
  #allocation2 [shape = 's32[1]{0}', space=sflag, size = 0x4, scoped, tag = 'scoped memory for tpu_custom_call.1']
  #allocation3 [shape = 'u8[512]{0}', space=smem, size = 0x200, scoped, tag = 'prefetched SMEM operand 0']
  %s0 = inlined_call_operand.hbm [shape: s32[5], index: 0, kind: input, shape index: {}]
  %s1 = inlined_call_operand.hbm [shape: f32[1,8,32], index: 1, kind: input, shape index: {}]
  %s2 = inlined_call_operand.vmem [shape: f32[1,5,32], index: 2, kind: output, shape index: {}]
  %s3 = sld [smem:[#allocation0]]
  $region18: #{tpu_custom_call.1} parent=0
    _
  %s5 = ssub.s32 1, %s3
  %s6 = scalar_select 0, %s5, %s3
  %s8 = sshll.u32 %s0, 4
  %s9 = int_to_ptr.hbm [resolvable:$true] %s8
  %11 = dma.hbm_to_smem %s9, 16, [#allocation3], [#allocation2]
  %13 = dma.done [#allocation2], 16
  %14 = sfence
  $region1: #{tpu_custom_call.1} parent=0
    #allocation4 [shape = 'u8[4096]{0}', space=vmem, size = 0x1000, scoped, tag = 'input window, operand 1, single buffered']
    #allocation5 [shape = 's32[1]{0}', space=sflag, size = 0x4, scoped, tag = 'scoped memory for tpu_custom_call.1']
    %15 = vsyncpa [#allocation5], 0
    // Predicated region
    $region2: #{tpu_custom_call.1} parent=1 // pred_check
      _
    $region3: #{tpu_custom_call.1} parent=1 // pred_check_branch
      %17 = sbr.rel (0) target = $region5
    $region4: #{tpu_custom_call.1} parent=1 // pred_region
      %19 = vsyncadd [#allocation5], 0
      %s21 = sshll.u32 %s1, 4
      %s22 = int_to_ptr.hbm [resolvable:$true] %s21
      %s23 = sshll.u32 [#allocation4], 4
      %s24 = int_to_ptr.vmem [resolvable:$true] %s23
      %26 = dma.hbm_to_vmem [thread:$0]  %s22, 128, %s24, [#allocation5]
    $region5: #{tpu_custom_call.1} parent=1 // pred_fallthru
      _
    // Predicated region
    $region6: #{tpu_custom_call.1} parent=1 // pred_check
      _
    $region7: #{tpu_custom_call.1} parent=1 // pred_check_branch
      %28 = sbr.rel (0) target = $region9
    $region8: #{tpu_custom_call.1} parent=1 // pred_region
      %30 = dma.done [#allocation5], 128
    $region9: #{tpu_custom_call.1} parent=1 // pred_fallthru
      _
    %s31 = smul.u32 0, 5
    %p32 = scmp.lt.s32.totalorder %s31, 4
    %s33 = scalar_select %p32, %s31, 4
    %s34 = sld [smem:[#allocation3 + %s33]]
    %p35 = scmp.gt.s32.totalorder %s34, 0
    %s36 = scalar_select %p35, %s34, 0
    %p37 = scmp.lt.s32.totalorder %s36, 7
    %s38 = scalar_select %p37, %s36, 7
    %s39 = scalar_lea.vmem [#allocation4], %s38
    %v40 = vld [vmem:[%s39] sm:$0x1]
    %vm41 = vcmask 253952
    %42 = vst.msk [vmem:[%s2] sm:$0x1] %vm41, %v40
    %s43 = sadd.s32 %s31, 1
    %p44 = scmp.lt.s32.totalorder %s43, 4
    %s45 = scalar_select %p44, %s43, 4
    %s46 = sld [smem:[#allocation3 + %s45]]
    %p47 = scmp.gt.s32.totalorder %s46, 0
    %s48 = scalar_select %p47, %s46, 0
    %p49 = scmp.lt.s32.totalorder %s48, 7
    %s50 = scalar_select %p49, %s48, 7
    %s51 = scalar_lea.vmem [#allocation4], %s50
    %v52 = vld [vmem:[%s51] sm:$0x1]
    %53 = vst.msk [vmem:[%s2 + $0x1] sm:$0x1] %vm41, %v52
    %s54 = sadd.s32 %s31, 2
    %p55 = scmp.lt.s32.totalorder %s54, 4
    %s56 = scalar_select %p55, %s54, 4
    %s57 = sld [smem:[#allocation3 + %s56]]
    %p58 = scmp.gt.s32.totalorder %s57, 0
    %s59 = scalar_select %p58, %s57, 0
    %p60 = scmp.lt.s32.totalorder %s59, 7
    %s61 = scalar_select %p60, %s59, 7
    %s62 = scalar_lea.vmem [#allocation4], %s61
    %v63 = vld [vmem:[%s62] sm:$0x1]
    %64 = vst.msk [vmem:[%s2 + $0x2] sm:$0x1] %vm41, %v63
    %s65 = sadd.s32 %s31, 3
    %p66 = scmp.lt.s32.totalorder %s65, 4
    %s67 = scalar_select %p66, %s65, 4
    %s68 = sld [smem:[#allocation3 + %s67]]
    %p69 = scmp.gt.s32.totalorder %s68, 0
    %s70 = scalar_select %p69, %s68, 0
    %p71 = scmp.lt.s32.totalorder %s70, 7
    %s72 = scalar_select %p71, %s70, 7
    %s73 = scalar_lea.vmem [#allocation4], %s72
    %v74 = vld [vmem:[%s73] sm:$0x1]
    %75 = vst.msk [vmem:[%s2 + $0x3] sm:$0x1] %vm41, %v74
    %s76 = sadd.s32 %s31, 4
    %p77 = scmp.lt.s32.totalorder %s76, 4
    %s78 = scalar_select %p77, %s76, 4
    %s79 = sld [smem:[#allocation3 + %s78]]
    %p80 = scmp.gt.s32.totalorder %s79, 0
    %s81 = scalar_select %p80, %s79, 0
    %p82 = scmp.lt.s32.totalorder %s81, 7
    %s83 = scalar_select %p82, %s81, 7
    %s84 = scalar_lea.vmem [#allocation4], %s83
    %v85 = vld [vmem:[%s84] sm:$0x1]
    %86 = vst.msk [vmem:[%s2 + $0x4] sm:$0x1] %vm41, %v85
    // Predicated region
    $region10: #{tpu_custom_call.1} parent=1 // pred_check
      _
    $region11: #{tpu_custom_call.1} parent=1 // pred_check_branch
      %88 = sbr.rel (0) target = $region13
    $region12: #{tpu_custom_call.1} parent=1 // pred_region
      _
    $region13: #{tpu_custom_call.1} parent=1 // pred_fallthru
      _
    // Predicated region
    $region14: #{tpu_custom_call.1} parent=1 // pred_check
      _
    $region15: #{tpu_custom_call.1} parent=1 // pred_check_branch
      %90 = sbr.rel (0) target = $region17
    $region16: #{tpu_custom_call.1} parent=1 // pred_region
      _
    $region17: #{tpu_custom_call.1} parent=1 // pred_fallthru
      _
    %91 = vsyncpa [#allocation5], 1

</llo_original>
